<compile_context>
chip_gen: v7x
topology: tpu7x:2x2x1
jax: 0.10.0
libtpu: 0.0.40
codegen_flags: <defaults>
</compile_context>

<pallas_src>
from functools import partial

import jax
import jax.numpy as jnp
from jax.experimental import pallas as pl
from jax.experimental.pallas import tpu as pltpu


# ---------------------------------------------------------------------------
# Kernel 1: per-class covariance of support descriptors
# ---------------------------------------------------------------------------
def _covariance_kernel(f_ref, cov_ref):
    """f_ref: (1, D, C) support descriptors of one class (D = shot*h*w, C on lanes)
       cov_ref: (1, C, C) covariance matrix of that class."""
    f = f_ref[0]                                        # (D, C)
    fc = f - jnp.mean(f, axis=0, keepdims=True)         # center over descriptors
    # Cov = fc^T @ fc  (contract the descriptor axis on the MXU, no XLU transpose)
    cov = jax.lax.dot_general(
        fc, fc, (((0,), (0,)), ((), ())),
        preferred_element_type=jnp.float32)              # (C, C)
    inv_n = 1.0 / float(f_ref.shape[1] - 1)              # / (n_local_descriptor - 1)
    cov_ref[0] = (cov * inv_n).astype(cov_ref.dtype)


# ---------------------------------------------------------------------------
# Kernel 2: covariance similarity + LeakyReLU + Conv1d(k=S, stride=S), fused
# ---------------------------------------------------------------------------
def _cova_sim_conv_kernel(q_ref, cov_ref, w_ref, b_ref, o_ref):
    """q_ref  : (1, S, C)    one query image, channels on lanes
       cov_ref: (way, C, C)  class covariance matrices (grid-invariant, VMEM-resident)
       w_ref  : (1, S)       Conv1d weight (kernel_size == S)
       b_ref  : (1, 1)       Conv1d bias
       o_ref  : (1, 1, way)  scores for this query."""
    q = q_ref[0]                                         # (S, C)
    qc = q - jnp.mean(q, axis=0, keepdims=True)          # center over spatial locations

    way = cov_ref.shape[0]
    sims = []
    for j in range(way):                                 # small static loop -> unrolled
        m = jnp.dot(qc, cov_ref[j],
                    preferred_element_type=jnp.float32)   # (S, C) on the MXU
        # diag(Qc @ Cov_j @ Qc^T): row-wise dot of m with qc
        sims.append(jnp.sum(m * qc, axis=-1, keepdims=True))   # (S, 1)
    sim = jnp.concatenate(sims, axis=-1)                  # (S, way)

    act = jnp.where(sim >= 0.0, sim, 0.2 * sim)           # LeakyReLU(0.2); Dropout = id
    scores = jnp.dot(w_ref[...].astype(jnp.float32), act,
                     preferred_element_type=jnp.float32)   # (1, way)
    o_ref[0] = (scores + b_ref[...].astype(jnp.float32)).astype(o_ref.dtype)


# ---------------------------------------------------------------------------
# Wrapper
# ---------------------------------------------------------------------------
@partial(jax.jit, static_argnames=("shot_num",))
def covariance_metric_forward(x1, x2, conv_w, conv_b, shot_num):
    """x1: (B, C, h, w) query set; x2: (way*shot, C, h, w) support set;
       conv_w: (h*w,) Conv1d(1,1,kernel=h*w,stride=h*w) weight; conv_b: () bias.
       Returns scores (B, way)."""
    B, C, h, w = x1.shape
    Ns = x2.shape[0]
    S = h * w                          # module hardcodes kernel_size=441 = 21*21; here S = h*w
    way = Ns // shot_num
    D = shot_num * S

    # --- layout glue (plain JAX, cheap): channels -> lane axis -----------------
    support = x2.reshape(Ns, C, S).transpose(0, 2, 1).reshape(way, D, C)   # (way, D, C)
    query = x1.reshape(B, C, S).transpose(0, 2, 1)                          # (B, S, C)
    w2d = conv_w.reshape(1, S).astype(jnp.float32)
    b2d = conv_b.reshape(1, 1).astype(jnp.float32)

    cparams = pltpu.CompilerParams(
        dimension_semantics=("parallel",),
        vmem_limit_bytes=32 * 1024 * 1024,
    )

    # --- per-class covariance matrices (grid over way) -------------------------
    cov = pl.pallas_call(
        _covariance_kernel,
        out_shape=jax.ShapeDtypeStruct((way, C, C), jnp.float32),
        grid_spec=pltpu.PrefetchScalarGridSpec(
            num_scalar_prefetch=0,
            grid=(way,),
            in_specs=[pl.BlockSpec((1, D, C), lambda j: (j, 0, 0))],
            out_specs=pl.BlockSpec((1, C, C), lambda j: (j, 0, 0)),
        ),
        compiler_params=cparams,
        cost_estimate=pl.CostEstimate(
            flops=2 * way * D * C * C,
            transcendentals=0,
            bytes_accessed=4 * (way * D * C + way * C * C),
        ),
    )(support)

    # --- covariance similarity + LeakyReLU + Conv1d, fused (grid over B) -------
    scores = pl.pallas_call(
        _cova_sim_conv_kernel,
        out_shape=jax.ShapeDtypeStruct((B, 1, way), jnp.float32),
        grid_spec=pltpu.PrefetchScalarGridSpec(
            num_scalar_prefetch=0,
            grid=(B,),
            in_specs=[
                pl.BlockSpec((1, S, C), lambda b: (b, 0, 0)),    # per-query block
                pl.BlockSpec((way, C, C), lambda b: (0, 0, 0)),  # grid-invariant cov
                pl.BlockSpec((1, S), lambda b: (0, 0)),          # conv weight
                pl.BlockSpec((1, 1), lambda b: (0, 0)),          # conv bias
            ],
            out_specs=pl.BlockSpec((1, 1, way), lambda b: (b, 0, 0)),
        ),
        compiler_params=cparams,
        cost_estimate=pl.CostEstimate(
            flops=2 * B * way * S * C * C + 2 * B * way * S * (C + 1),
            transcendentals=0,
            bytes_accessed=4 * (B * S * C + way * C * C + S + B * way),
        ),
    )(query, cov, w2d, b2d)

    return scores.reshape(B, way)


# ---------------------------------------------------------------------------
# Plain-JAX reference for correctness checking
# ---------------------------------------------------------------------------
def _ref_forward(x1, x2, conv_w, conv_b, shot_num):
    HI = jax.lax.Precision.HIGHEST
    Ns, C, h, w = x2.shape
    S = h * w
    way = Ns // shot_num
    D = shot_num * S

    f = x2.reshape(Ns, C, S).transpose(0, 2, 1).reshape(way, D, C)
    fc = f - jnp.mean(f, axis=1, keepdims=True)
    cov = jnp.einsum("ndc,nde->nce", fc, fc, precision=HI) / (D - 1)

    B = x1.shape[0]
    q = x1.reshape(B, C, S)
    qc = q - jnp.mean(q, axis=2, keepdims=True)                       # (B, C, S)
    sim = jnp.einsum("bcs,jcd,bds->bjs", qc, cov, qc, precision=HI)   # (B, way, S)
    act = jnp.where(sim >= 0.0, sim, 0.2 * sim)                       # LeakyReLU(0.2)
    scores = jnp.einsum("bjs,s->bj", act, conv_w, precision=HI) + conv_b
    return scores


if __name__ == "__main__":
    # Small shapes consistent with the module (way=4 classes, shot=3 supports,
    # C=32 channels, 4x4 feature maps, 8 query images; conv kernel = h*w = 16).
    way, shot, C, h, w = 4, 3, 32, 4, 4
    B = 8
    S = h * w

    key = jax.random.PRNGKey(0)
    k1, k2, k3, k4 = jax.random.split(key, 4)
    x1 = jax.random.normal(k1, (B, C, h, w), dtype=jnp.float32)            # query set
    x2 = jax.random.normal(k2, (way * shot, C, h, w), dtype=jnp.float32)   # support set
    conv_w = jax.random.normal(k3, (S,), dtype=jnp.float32) * 0.02         # Conv1d weight
    conv_b = jax.random.normal(k4, (), dtype=jnp.float32) * 0.02           # Conv1d bias

    scores = covariance_metric_forward(x1, x2, conv_w, conv_b, shot)
    jax.block_until_ready(scores)

    ref = _ref_forward(x1, x2, conv_w, conv_b, shot)
    assert scores.shape == (B, way)
    assert jnp.allclose(scores, ref, atol=2e-3, rtol=2e-3), (scores, ref)

    print("KERNEL_OK")
</pallas_src>

<mosaic_0001>
module attributes {stable_mosaic.version = 11 : i64} {
  func.func @_covariance_kernel(%arg0: i32, %arg1: memref<1x48x32xf32, #tpu.memory_space<vmem>>, %arg2: memref<1x32x32xf32, #tpu.memory_space<vmem>>) attributes {dimension_semantics = [#tpu.dimension_semantics<parallel>], iteration_bounds = array<i64: 4>, scalar_prefetch = 0 : i64, scratch_operands = 0 : i64, tpu.core_type = #tpu.core_type<tc>, window_params = [{transform_indices = @transform_0, window_bounds = array<i64: 1, 48, 32>}, {transform_indices = @transform_1, window_bounds = array<i64: 1, 32, 32>}]} {
    %c0 = arith.constant 0 : index
    %c0_0 = arith.constant 0 : index
    %c0_1 = arith.constant 0 : index
    %0 = vector.load %arg1[%c0, %c0_0, %c0_1] : memref<1x48x32xf32, #tpu.memory_space<vmem>>, vector<1x48x32xf32>
    %1 = vector.shape_cast %0 : vector<1x48x32xf32> to vector<48x32xf32>
    %cst = arith.constant dense<0.000000e+00> : vector<32xf32>
    %2 = vector.multi_reduction <add>, %1, %cst [0] : vector<48x32xf32> to vector<32xf32>
    %3 = vector.shape_cast %2 : vector<32xf32> to vector<1x32xf32>
    %cst_2 = arith.constant 4.800000e+01 : f32
    %4 = vector.broadcast %cst_2 : f32 to vector<1x32xf32>
    %5 = arith.divf %3, %4 : vector<1x32xf32>
    %6 = vector.broadcast %5 : vector<1x32xf32> to vector<48x32xf32>
    %7 = arith.subf %1, %6 : vector<48x32xf32>
    %cst_3 = arith.constant dense<0.000000e+00> : vector<32x32xf32>
    %8 = tpu.matmul %7, %7, %cst_3 {dimension_numbers = #tpu.dot_dimension_numbers<[0], [0], [1], [1], [0, 1, 1, 1], [], []>} : vector<48x32xf32>, vector<48x32xf32>, vector<32x32xf32> -> vector<32x32xf32>
    %cst_4 = arith.constant 0.0212765951 : f32
    %9 = vector.broadcast %cst_4 : f32 to vector<32x32xf32>
    %10 = arith.mulf %8, %9 : vector<32x32xf32>
    %c0_5 = arith.constant 0 : index
    %c0_6 = arith.constant 0 : index
    %c0_7 = arith.constant 0 : index
    %11 = vector.load %arg2[%c0_5, %c0_6, %c0_7] : memref<1x32x32xf32, #tpu.memory_space<vmem>>, vector<1x32x32xf32>
    %12 = vector.shape_cast %11 : vector<1x32x32xf32> to vector<32x32xf32>
    %13 = vector.shape_cast %10 : vector<32x32xf32> to vector<1x32x32xf32>
    tpu.vector_store %arg2[%c0_5, %c0_6, %c0_7], %13 {strides = array<i32>} : memref<1x32x32xf32, #tpu.memory_space<vmem>>, vector<1x32x32xf32>,
    return
  }
  func.func @transform_0(%arg0: i32) -> (i32, i32, i32) {
    %c0_i32 = arith.constant 0 : i32
    %c0_i32_0 = arith.constant 0 : i32
    %c0_i32_1 = arith.constant 0 : i32
    return %arg0, %c0_i32, %c0_i32_0 : i32, i32, i32
  }
  func.func @transform_1(%arg0: i32) -> (i32, i32, i32) {
    %c0_i32 = arith.constant 0 : i32
    %c0_i32_0 = arith.constant 0 : i32
    %c0_i32_1 = arith.constant 0 : i32
    return %arg0, %c0_i32, %c0_i32_0 : i32, i32, i32
  }
}

module attributes {stable_mosaic.version = 11 : i64} {
  func.func @_cova_sim_conv_kernel(%arg0: i32, %arg1: memref<1x16x32xf32, #tpu.memory_space<vmem>>, %arg2: memref<4x32x32xf32, #tpu.memory_space<vmem>>, %arg3: memref<1x16xf32, #tpu.memory_space<vmem>>, %arg4: memref<1x1xf32, #tpu.memory_space<vmem>>, %arg5: memref<1x1x4xf32, #tpu.memory_space<vmem>>) attributes {dimension_semantics = [#tpu.dimension_semantics<parallel>], iteration_bounds = array<i64: 8>, scalar_prefetch = 0 : i64, scratch_operands = 0 : i64, tpu.core_type = #tpu.core_type<tc>, window_params = [{transform_indices = @transform_0, window_bounds = array<i64: 1, 16, 32>}, {pipeline_mode = #tpu.pipeline_mode<synchronous>, transform_indices = @transform_1, window_bounds = array<i64: 4, 32, 32>}, {pipeline_mode = #tpu.pipeline_mode<synchronous>, transform_indices = @transform_2, window_bounds = array<i64: 1, 16>}, {pipeline_mode = #tpu.pipeline_mode<synchronous>, transform_indices = @transform_3, window_bounds = array<i64: 1, 1>}, {transform_indices = @transform_4, window_bounds = array<i64: 1, 1, 4>}]} {
    %c0 = arith.constant 0 : index
    %c0_0 = arith.constant 0 : index
    %c0_1 = arith.constant 0 : index
    %0 = vector.load %arg1[%c0, %c0_0, %c0_1] : memref<1x16x32xf32, #tpu.memory_space<vmem>>, vector<1x16x32xf32>
    %1 = vector.shape_cast %0 : vector<1x16x32xf32> to vector<16x32xf32>
    %cst = arith.constant dense<0.000000e+00> : vector<32xf32>
    %2 = vector.multi_reduction <add>, %1, %cst [0] : vector<16x32xf32> to vector<32xf32>
    %3 = vector.shape_cast %2 : vector<32xf32> to vector<1x32xf32>
    %cst_2 = arith.constant 1.600000e+01 : f32
    %4 = vector.broadcast %cst_2 : f32 to vector<1x32xf32>
    %5 = arith.divf %3, %4 : vector<1x32xf32>
    %6 = vector.broadcast %5 : vector<1x32xf32> to vector<16x32xf32>
    %7 = arith.subf %1, %6 : vector<16x32xf32>
    %c0_3 = arith.constant 0 : index
    %c0_4 = arith.constant 0 : index
    %c0_5 = arith.constant 0 : index
    %8 = vector.load %arg2[%c0_3, %c0_4, %c0_5] : memref<4x32x32xf32, #tpu.memory_space<vmem>>, vector<1x32x32xf32>
    %9 = vector.shape_cast %8 : vector<1x32x32xf32> to vector<32x32xf32>
    %cst_6 = arith.constant dense<0.000000e+00> : vector<16x32xf32>
    %10 = tpu.matmul %7, %9, %cst_6 {dimension_numbers = #tpu.dot_dimension_numbers<[1], [0], [0], [1], [0, 0, 1, 1], [], []>} : vector<16x32xf32>, vector<32x32xf32>, vector<16x32xf32> -> vector<16x32xf32>
    %11 = arith.mulf %10, %7 : vector<16x32xf32>
    %cst_7 = arith.constant dense<0.000000e+00> : vector<16xf32>
    %12 = vector.multi_reduction <add>, %11, %cst_7 [1] : vector<16x32xf32> to vector<16xf32>
    %13 = vector.shape_cast %12 : vector<16xf32> to vector<16x1xf32>
    %c1 = arith.constant 1 : index
    %c0_8 = arith.constant 0 : index
    %c0_9 = arith.constant 0 : index
    %14 = vector.load %arg2[%c1, %c0_8, %c0_9] : memref<4x32x32xf32, #tpu.memory_space<vmem>>, vector<1x32x32xf32>
    %15 = vector.shape_cast %14 : vector<1x32x32xf32> to vector<32x32xf32>
    %cst_10 = arith.constant dense<0.000000e+00> : vector<16x32xf32>
    %16 = tpu.matmul %7, %15, %cst_10 {dimension_numbers = #tpu.dot_dimension_numbers<[1], [0], [0], [1], [0, 0, 1, 1], [], []>} : vector<16x32xf32>, vector<32x32xf32>, vector<16x32xf32> -> vector<16x32xf32>
    %17 = arith.mulf %16, %7 : vector<16x32xf32>
    %cst_11 = arith.constant dense<0.000000e+00> : vector<16xf32>
    %18 = vector.multi_reduction <add>, %17, %cst_11 [1] : vector<16x32xf32> to vector<16xf32>
    %19 = vector.shape_cast %18 : vector<16xf32> to vector<16x1xf32>
    %c2 = arith.constant 2 : index
    %c0_12 = arith.constant 0 : index
    %c0_13 = arith.constant 0 : index
    %20 = vector.load %arg2[%c2, %c0_12, %c0_13] : memref<4x32x32xf32, #tpu.memory_space<vmem>>, vector<1x32x32xf32>
    %21 = vector.shape_cast %20 : vector<1x32x32xf32> to vector<32x32xf32>
    %cst_14 = arith.constant dense<0.000000e+00> : vector<16x32xf32>
    %22 = tpu.matmul %7, %21, %cst_14 {dimension_numbers = #tpu.dot_dimension_numbers<[1], [0], [0], [1], [0, 0, 1, 1], [], []>} : vector<16x32xf32>, vector<32x32xf32>, vector<16x32xf32> -> vector<16x32xf32>
    %23 = arith.mulf %22, %7 : vector<16x32xf32>
    %cst_15 = arith.constant dense<0.000000e+00> : vector<16xf32>
    %24 = vector.multi_reduction <add>, %23, %cst_15 [1] : vector<16x32xf32> to vector<16xf32>
    %25 = vector.shape_cast %24 : vector<16xf32> to vector<16x1xf32>
    %c3 = arith.constant 3 : index
    %c0_16 = arith.constant 0 : index
    %c0_17 = arith.constant 0 : index
    %26 = vector.load %arg2[%c3, %c0_16, %c0_17] : memref<4x32x32xf32, #tpu.memory_space<vmem>>, vector<1x32x32xf32>
    %27 = vector.shape_cast %26 : vector<1x32x32xf32> to vector<32x32xf32>
    %cst_18 = arith.constant dense<0.000000e+00> : vector<16x32xf32>
    %28 = tpu.matmul %7, %27, %cst_18 {dimension_numbers = #tpu.dot_dimension_numbers<[1], [0], [0], [1], [0, 0, 1, 1], [], []>} : vector<16x32xf32>, vector<32x32xf32>, vector<16x32xf32> -> vector<16x32xf32>
    %29 = arith.mulf %28, %7 : vector<16x32xf32>
    %cst_19 = arith.constant dense<0.000000e+00> : vector<16xf32>
    %30 = vector.multi_reduction <add>, %29, %cst_19 [1] : vector<16x32xf32> to vector<16xf32>
    %31 = vector.shape_cast %30 : vector<16xf32> to vector<16x1xf32>
    %32 = tpu.concatenate %13, %19, %25, %31 in 1 : vector<16x1xf32>, vector<16x1xf32>, vector<16x1xf32>, vector<16x1xf32> -> vector<16x4xf32>
    %cst_20 = arith.constant 0.000000e+00 : f32
    %33 = vector.broadcast %cst_20 : f32 to vector<16x4xf32>
    %34 = arith.cmpf oge, %32, %33 : vector<16x4xf32>
    %cst_21 = arith.constant 2.000000e-01 : f32
    %35 = vector.broadcast %cst_21 : f32 to vector<16x4xf32>
    %36 = arith.mulf %35, %32 : vector<16x4xf32>
    %37 = arith.select %34, %32, %36 : vector<16x4xi1>, vector<16x4xf32>
    %c0_22 = arith.constant 0 : index
    %c0_23 = arith.constant 0 : index
    %38 = vector.load %arg3[%c0_22, %c0_23] : memref<1x16xf32, #tpu.memory_space<vmem>>, vector<1x16xf32>
    %cst_24 = arith.constant dense<0.000000e+00> : vector<1x4xf32>
    %39 = tpu.matmul %38, %37, %cst_24 {dimension_numbers = #tpu.dot_dimension_numbers<[1], [0], [0], [1], [0, 0, 1, 1], [], []>} : vector<1x16xf32>, vector<16x4xf32>, vector<1x4xf32> -> vector<1x4xf32>
    %c0_25 = arith.constant 0 : index
    %c0_26 = arith.constant 0 : index
    %40 = vector.load %arg4[%c0_25, %c0_26] : memref<1x1xf32, #tpu.memory_space<vmem>>, vector<1x1xf32>
    %41 = vector.broadcast %40 : vector<1x1xf32> to vector<1x4xf32>
    %42 = arith.addf %39, %41 : vector<1x4xf32>
    %c0_27 = arith.constant 0 : index
    %c0_28 = arith.constant 0 : index
    %c0_29 = arith.constant 0 : index
    %43 = vector.load %arg5[%c0_27, %c0_28, %c0_29] : memref<1x1x4xf32, #tpu.memory_space<vmem>>, vector<1x1x4xf32>
    %44 = vector.shape_cast %43 : vector<1x1x4xf32> to vector<1x4xf32>
    %45 = vector.shape_cast %42 : vector<1x4xf32> to vector<1x1x4xf32>
    tpu.vector_store %arg5[%c0_27, %c0_28, %c0_29], %45 {strides = array<i32>} : memref<1x1x4xf32, #tpu.memory_space<vmem>>, vector<1x1x4xf32>,
    return
  }
  func.func @transform_0(%arg0: i32) -> (i32, i32, i32) {
    %c0_i32 = arith.constant 0 : i32
    %c0_i32_0 = arith.constant 0 : i32
    %c0_i32_1 = arith.constant 0 : i32
    return %arg0, %c0_i32, %c0_i32_0 : i32, i32, i32
  }
  func.func @transform_1(%arg0: i32) -> (i32, i32, i32) {
    %c0_i32 = arith.constant 0 : i32
    %c0_i32_0 = arith.constant 0 : i32
    %c0_i32_1 = arith.constant 0 : i32
    %c0_i32_2 = arith.constant 0 : i32
    return %c0_i32, %c0_i32_0, %c0_i32_1 : i32, i32, i32
  }
  func.func @transform_2(%arg0: i32) -> (i32, i32) {
    %c0_i32 = arith.constant 0 : i32
    %c0_i32_0 = arith.constant 0 : i32
    %c0_i32_1 = arith.constant 0 : i32
    return %c0_i32, %c0_i32_0 : i32, i32
  }
  func.func @transform_3(%arg0: i32) -> (i32, i32) {
    %c0_i32 = arith.constant 0 : i32
    %c0_i32_0 = arith.constant 0 : i32
    %c0_i32_1 = arith.constant 0 : i32
    return %c0_i32, %c0_i32_0 : i32, i32
  }
  func.func @transform_4(%arg0: i32) -> (i32, i32, i32) {
    %c0_i32 = arith.constant 0 : i32
    %c0_i32_0 = arith.constant 0 : i32
    %c0_i32_1 = arith.constant 0 : i32
    return %arg0, %c0_i32, %c0_i32_0 : i32, i32, i32
  }
}

</mosaic_0001>

<llo_original>
// kernel: covariance_metric_forward.2
$region0: #{covariance_metric_forward.2}
  #allocation0 [shape = 'u32[]', space=smem, size = 0x4, offset = 0x4, fixed_abs, tag = 'smem constant byte address 0x4 - core index']
  #allocation1 [shape = 'u32[144,128]{1,0:T(1,128)}', space=vmem, size = 0x12000, scoped, tag = 'internal scratch']
  %s0 = inlined_call_operand.hbm [shape: f32[4,48,32], index: 0, kind: input, shape index: {}]
  %s1 = inlined_call_operand.vmem [shape: f32[4,32,32], index: 1, kind: output, shape index: {}]
  %s2 = sld [smem:[#allocation0]]
  $region41: #{covariance_metric_forward.2} parent=0
    _
  %s4 = ssub.s32 1, %s2
  %s5 = scalar_select 0, %s4, %s2
  $region1: #{covariance_metric_forward.2} parent=0
    #allocation2 [shape = 'u8[49152]{0}', space=vmem, size = 0xc000, scoped, tag = 'input window, operand 0']
    #allocation3 [shape = 's32[2]{0}', space=sflag, size = 0x8, scoped, tag = 'scoped memory for covariance_metric_forward.2']
    %6 = vsyncpa [#allocation3], 0
    %s7 = scalar_lea.sflag [#allocation3], 1
    %8 = vsyncpa %s7, 0
    loop: start=0, step=1, limit=6
    $region2: #{covariance_metric_forward.2} parent=1 // loop_pre_header
      _
    $region3: #{covariance_metric_forward.2} parent=1 // loop_header
      %s10 = sphi 0, %s14
      %p11 = scmp.ge.s32.totalorder %s10, 6
      %s20 = sphi 0, %s22
      %s23 = sphi 0, %s20
      %s24 = sphi 0, %s23
      %s40 = sphi 0, %s24
      %s46 = sphi 0, %s48
      %s49 = sphi 0, %s46
      %s50 = sphi 0, %s49
      %s66 = sphi 0, %s50
    $region4: #{covariance_metric_forward.2} parent=1 // loop_header_branch
      %13 = sbr.rel (%p11) target = $region8
    $region5: #{covariance_metric_forward.2} parent=1 // loop_body
      %s15 = ssub.s32 %s10, 1
      %s16 = ssub.s32 %s10, 2
      %s17 = sadd.s32 %s10, 1
      %s18 = ssub.s32 %s10, %s17
      %p19 = scmp.eq.s32.totalorder %s18, 0
      %s21 = sadd.s32 %s20, 1
      %s22 = scalar_select %p19, %s20, %s21
      %p25 = pneg %p19
      %p26 = scmp.eq.s32.totalorder %s10, 3
      %p27 = por %p25, %p26
      %p28 = scmp.ne.s32.totalorder %s20, %s23
      %p29 = scmp.eq.s32.totalorder %s10, 0
      %p30 = por %p28, %p29
      %p31 = scmp.ne.s32.totalorder %s20, %s23
      %p32 = scmp.eq.s32.totalorder %s15, 3
      %p33 = por %p31, %p32
      %p34 = scmp.ne.s32.totalorder %s23, %s24
      %p35 = scmp.eq.s32.totalorder %s15, 0
      %p36 = por %p34, %p35
      %p37 = scmp.ne.s32.totalorder %s23, %s24
      %p38 = scmp.eq.s32.totalorder %s16, 3
      %p39 = por %p37, %p38
      %p41 = scmp.ne.s32.totalorder %s24, %s40
      %p42 = scmp.eq.s32.totalorder %s16, 0
      %p43 = por %p41, %p42
      %s44 = ssub.s32 %s10, %s17
      %p45 = scmp.eq.s32.totalorder %s44, 0
      %s47 = sadd.s32 %s46, 1
      %s48 = scalar_select %p45, %s46, %s47
      %p51 = pneg %p45
      %p52 = scmp.eq.s32.totalorder %s10, 3
      %p53 = por %p51, %p52
      %p54 = scmp.ne.s32.totalorder %s46, %s49
      %p55 = scmp.eq.s32.totalorder %s10, 0
      %p56 = por %p54, %p55
      %p57 = scmp.ne.s32.totalorder %s46, %s49
      %p58 = scmp.eq.s32.totalorder %s15, 3
      %p59 = por %p57, %p58
      %p60 = scmp.ne.s32.totalorder %s49, %s50
      %p61 = scmp.eq.s32.totalorder %s15, 0
      %p62 = por %p60, %p61
      %p63 = scmp.ne.s32.totalorder %s49, %s50
      %p64 = scmp.eq.s32.totalorder %s16, 3
      %p65 = por %p63, %p64
      %p67 = scmp.ne.s32.totalorder %s50, %s66
      %p68 = scmp.eq.s32.totalorder %s16, 0
      %p69 = por %p67, %p68
      %p70 = scmp.le.s32.totalorder 1, %s10
      %p71 = scmp.lt.s32.totalorder %s10, 5
      %p72 = pnand %p70, %p71
      %p73 = pneg %p72
      // Predicated region
      $region9: #{covariance_metric_forward.2} parent=5 // pred_check
        _
      $region10: #{covariance_metric_forward.2} parent=5 // pred_check_branch
        %75 = sbr.rel (%p72) target = $region12
      $region11: #{covariance_metric_forward.2} parent=5 // pred_region
        %s76 = ssub.s32 %s10, 1
      $region12: #{covariance_metric_forward.2} parent=5 // pred_fallthru
        _
      %p77 = scmp.lt.s32.totalorder %s10, 4
      // Predicated region
      $region13: #{covariance_metric_forward.2} parent=5 // pred_check
        %p78 = pneg %p77
      $region14: #{covariance_metric_forward.2} parent=5 // pred_check_branch
        %80 = sbr.rel (%p78) target = $region16
      $region15: #{covariance_metric_forward.2} parent=5 // pred_region
        // Predicated region
        $region17: #{covariance_metric_forward.2} parent=15 // pred_check
          %p81 = pneg %p30
        $region18: #{covariance_metric_forward.2} parent=15 // pred_check_branch
          %83 = sbr.rel (%p81) target = $region20
        $region19: #{covariance_metric_forward.2} parent=15 // pred_region
          %s84 = sand.u32 %s20, 1
          %s85 = scalar_lea.sflag [#allocation3], %s84
          %s86 = sand.u32 %s20, 1
          %s87 = smul.addr %s86, 48
          %s88 = scalar_lea.vmem [#allocation2], %s87
          %s90 = ssub.s32 768, 768
          %91 = vsyncadd %s85, %s90
          %s92 = smul.addr %s10, 6
          %s93 = smul.addr %s92, 128
          %s94 = scalar_lea.hbm %s0, %s93
          %s95 = sshll.u32 %s88, 4
          %s96 = int_to_ptr.vmem [resolvable:$true] %s95
          %101 = dma.hbm_to_vmem [thread:$0]  %s94, 768, %s96, %s85, 128, 128, 8
        $region20: #{covariance_metric_forward.2} parent=15 // pred_fallthru
          _
      $region16: #{covariance_metric_forward.2} parent=5 // pred_fallthru
        _
      %p102 = scmp.le.s32.totalorder 1, %s10
      %p103 = scmp.lt.s32.totalorder %s10, 5
      %p104 = pnand %p102, %p103
      %p105 = pneg %p104
      // Predicated region
      $region21: #{covariance_metric_forward.2} parent=5 // pred_check
        _
      $region22: #{covariance_metric_forward.2} parent=5 // pred_check_branch
        %107 = sbr.rel (%p104) target = $region24
      $region23: #{covariance_metric_forward.2} parent=5 // pred_region
        %s108 = ssub.s32 %s10, 1
        %s109 = sand.u32 %s23, 1
        %s110 = scalar_lea.sflag [#allocation3], %s109
        %s111 = sand.u32 %s23, 1
        %s112 = smul.addr %s111, 48
        %s113 = scalar_lea.vmem [#allocation2], %s112
        // Predicated region
        $region25: #{covariance_metric_forward.2} parent=23 // pred_check
          %p114 = pneg %p36
        $region26: #{covariance_metric_forward.2} parent=23 // pred_check_branch
          %116 = sbr.rel (%p114) target = $region28
        $region27: #{covariance_metric_forward.2} parent=23 // pred_region
          %117 = dma.done %s110, 768
        $region28: #{covariance_metric_forward.2} parent=23 // pred_fallthru
          _
        %s118 = sand.u32 %s23, 1
        %s119 = scalar_lea.sflag [#allocation3], %s118
        %s120 = sand.u32 %s23, 1
        %s121 = smul.addr %s120, 48
        %s122 = scalar_lea.vmem [#allocation2], %s121
        %p123 = pneg %p36
        %p124 = pneg %p33
        %p125 = pneg %p62
        %p126 = pneg %p59
        %p127 = scmp.lt.s32.totalorder %s15, 3
        %s128 = scalar_select %p127, %s15, 3
        %s129 = smul.addr %s128, 4
        %s130 = smul.addr %s129, 8
        %s131 = scalar_lea.vmem %s1, %s130
        %p132 = scmp.lt.s32.totalorder %s15, 3
        %s133 = scalar_select %p132, %s15, 3
        %s134 = smul.addr %s133, 4
        %s135 = smul.addr %s134, 8
        %s136 = scalar_lea.vmem %s1, %s135
        %v137 = vld [vmem:[%s113] sm:$0xff]
        %v138 = vld [vmem:[%s113 + $0x8] sm:$0xff]
        %v139 = vld [vmem:[%s113 + $0x10] sm:$0xff]
        %v140 = vld [vmem:[%s113 + $0x18] sm:$0xff]
        %v141 = vld [vmem:[%s113 + $0x20] sm:$0xff]
        %v142 = vld [vmem:[%s113 + $0x28] sm:$0xff]
        %vm143 = vcmask 261120
        %v144 = vsel %vm143, %v137, 0.0
        %v145 = vsel %vm143, %v138, 0.0
        %v146 = vadd.f32 %v144, %v145
        %v147 = vsel %vm143, %v139, 0.0
        %v148 = vadd.f32 %v146, %v147
        %v149 = vsel %vm143, %v140, 0.0
        %v150 = vadd.f32 %v148, %v149
        %v151 = vsel %vm143, %v141, 0.0
        %v152 = vadd.f32 %v150, %v151
        %v153 = vsel %vm143, %v142, 0.0
        %v154 = vadd.f32 %v152, %v153
        %v155 = vrot.slane %v154, 4
        %v156 = vadd.f32 %v154, %v155
        %v157 = vrot.slane %v156, 2
        %v158 = vadd.f32 %v156, %v157
        %v159 = vrot.slane %v158, 1
        %v160 = vadd.f32 %v158, %v159
        %v161 = vrcp.pop 48.0
        %v162 = vmul.f32 %v160, %v161
        %v163 = vsub.f32 %v137, %v162
        %v164 = vsub.f32 %v138, %v162
        %v165 = vsub.f32 %v139, %v162
        %v166 = vsub.f32 %v140, %v162
        %v167 = vsub.f32 %v141, %v162
        %v168 = vsub.f32 %v142, %v162
        %169 = vxpose.xlu0.b32.start [1/16] %v163, 128
        %170 = vxpose.xlu0.b32.cont [2/16] %v164, 128
        %171 = vxpose.xlu0.b32.cont [3/16] %v165, 128
        %172 = vxpose.xlu0.b32.cont [4/16] %v166, 128
        %173 = vxpose.xlu0.b32.cont [5/16] %v167, 128
        %174 = vxpose.xlu0.b32.cont [6/16] %v168, 128
        %175 = vxpose.xlu0.b32.cont [7/16] 0.0, 128
        %176 = vxpose.xlu0.b32.cont [8/16] 0.0, 128
        %177 = vxpose.xlu0.b32.cont [9/16] 0.0, 128
        %178 = vxpose.xlu0.b32.cont [10/16] 0.0, 128
        %179 = vxpose.xlu0.b32.cont [11/16] 0.0, 128
        %180 = vxpose.xlu0.b32.cont [12/16] 0.0, 128
        %181 = vxpose.xlu0.b32.cont [13/16] 0.0, 128
        %182 = vxpose.xlu0.b32.cont [14/16] 0.0, 128
        %183 = vxpose.xlu0.b32.cont [15/16] 0.0, 128
        %184 = vxpose.xlu0.b32.end [16/16] 0.0, 128
        %v185 = vpop.trf.xlu0
        %v186 = vpop.trf.xlu0
        %v187 = vpop.trf.xlu0
        %v188 = vpop.trf.xlu0
        %v189 = vpop.trf.xlu0
        %v190 = vpop.trf.xlu0
        %v191 = vpop.trf.xlu0
        %v192 = vpop.trf.xlu0
        %v193 = vpop.trf.xlu0
        %v194 = vpop.trf.xlu0
        %v195 = vpop.trf.xlu0
        %v196 = vpop.trf.xlu0
        %v197 = vpop.trf.xlu0
        %v198 = vpop.trf.xlu0
        %v199 = vpop.trf.xlu0
        %v200 = vpop.trf.xlu0
        %vm201 = vcmask 392192
        %v203 = vsel %vm201, %v185, 0
        %v206 = vsel %vm201, %v186, 0
        %v209 = vsel %vm201, %v187, 0
        %v212 = vsel %vm201, %v188, 0
        %214 = vmatprep.subr.mxu0 0.0
        %215 = vmatpush1.msra.mxu0 %v163
        %216 = vmatprep.subr.mxu0 0.0
        %217 = vmatpush1.msra.mxu0 %v164
        %218 = vmatprep.subr.mxu0 0.0
        %219 = vmatpush1.msra.mxu0 %v165
        %220 = vmatprep.subr.mxu0 0.0
        %221 = vmatpush1.msra.mxu0 %v166
        %222 = vmatprep.subr.mxu0 0.0
        %223 = vmatpush1.msra.mxu0 %v167
        %224 = vmatprep.subr.mxu0 0.0
        %225 = vmatpush1.msra.mxu0 %v168
        %226 = vmatprep.subr.mxu0 0.0
        %227 = vmatpush1.msra.mxu0 0.0
        %228 = vmatprep.subr.mxu0 0.0
        %229 = vmatpush1.msra.mxu0 0.0
        %230 = vmatprep.subr.mxu0 0.0
        %231 = vmatpush1.msra.mxu0 0.0
        %232 = vmatprep.subr.mxu0 0.0
        %233 = vmatpush1.msra.mxu0 0.0
        %234 = vmatprep.subr.mxu0 0.0
        %235 = vmatpush1.msra.mxu0 0.0
        %236 = vmatprep.subr.mxu0 0.0
        %237 = vmatpush1.msra.mxu0 0.0
        %238 = vmatprep.subr.mxu0 0.0
        %239 = vmatpush1.msra.mxu0 0.0
        %240 = vmatprep.subr.mxu0 0.0
        %241 = vmatpush1.msra.mxu0 0.0
        %242 = vmatprep.subr.mxu0 0.0
        %243 = vmatpush1.msra.mxu0 0.0
        %244 = vmatprep.subr.mxu0 0.0
        %245 = vmatpush1.msra.mxu0 0.0
        %246 = vmatprep.subr.mxu0 0.0
        %247 = vmatpush1.msra.mxu0 0.0
        %248 = vmatprep.subr.mxu0 0.0
        %249 = vmatpush1.msra.mxu0 0.0
        %250 = vmatprep.subr.mxu0 0.0
        %251 = vmatpush1.msra.mxu0 0.0
        %252 = vmatprep.subr.mxu0 0.0
        %253 = vmatpush1.msra.mxu0 0.0
        %254 = vmatprep.subr.mxu0 0.0
        %255 = vmatpush1.msra.mxu0 0.0
        %256 = vmatprep.subr.mxu0 0.0
        %257 = vmatpush1.msra.mxu0 0.0
        %258 = vmatprep.subr.mxu0 0.0
        %259 = vmatpush1.msra.mxu0 0.0
        %260 = vmatprep.subr.mxu0 0.0
        %261 = vmatpush1.msra.mxu0 0.0
        %262 = vmatprep.subr.mxu0 0.0
        %263 = vmatpush1.msra.mxu0 0.0
        %264 = vmatprep.subr.mxu0 0.0
        %265 = vmatpush1.msra.mxu0 0.0
        %266 = vmatprep.subr.mxu0 0.0
        %267 = vmatpush1.msra.mxu0 0.0
        %268 = vmatprep.subr.mxu0 0.0
        %269 = vmatpush1.msra.mxu0 0.0
        %270 = vmatprep.subr.mxu0 0.0
        %271 = vmatpush1.msra.mxu0 0.0
        %272 = vmatprep.subr.mxu0 0.0
        %273 = vmatpush1.msra.mxu0 0.0
        %274 = vmatprep.subr.mxu0 0.0
        %275 = vmatpush1.msra.mxu0 0.0
        %276 = vmatprep.subr.mxu0 0.0
        %277 = vmatpush1.msra.mxu0 0.0
        %278 = vmatprep.mubr.f32.mxu0 0.0
        %279 = vmatmul.mubr.f32.gmra.mrb[0].mxu0 %v203
        %v280 = vpop.f32.mrb[0].mxu0
        %v281 = vadd.f32 0.0, %v280
        %v282 = vpop.f32.mrb[0].mxu0
        %283 = vmatprep.mubr.f32.mxu0 0.0
        %284 = vmatmul.mubr.f32.gmra.mrb[0].mxu0 %v206
        %v285 = vpop.f32.mrb[0].mxu0
        %v286 = vadd.f32 0.0, %v285
        %v287 = vpop.f32.mrb[0].mxu0
        %288 = vmatprep.mubr.f32.mxu0 0.0
        %289 = vmatmul.mubr.f32.gmra.mrb[0].mxu0 %v209
        %v290 = vpop.f32.mrb[0].mxu0
        %v291 = vadd.f32 0.0, %v290
        %v292 = vpop.f32.mrb[0].mxu0
        %293 = vmatprep.mubr.f32.mxu0 0.0
        %294 = vmatmul.mubr.f32.gmra.mrb[0].mxu0 %v212
        %v295 = vpop.f32.mrb[0].mxu0
        %v296 = vadd.f32 0.0, %v295
        %v297 = vpop.f32.mrb[0].mxu0
        %298 = vdwg.mxu0
        %v299 = vmul.f32 %v281, 0.021276595
        %v300 = vmul.f32 %v286, 0.021276595
        %v301 = vmul.f32 %v291, 0.021276595
        %v302 = vmul.f32 %v296, 0.021276595
        %303 = vst.msk [vmem:[%s136] sm:$0xff] %vm143, %v299
        %304 = vst.msk [vmem:[%s136 + $0x8] sm:$0xff] %vm143, %v300
        %305 = vst.msk [vmem:[%s136 + $0x10] sm:$0xff] %vm143, %v301
        %306 = vst.msk [vmem:[%s136 + $0x18] sm:$0xff] %vm143, %v302
        %p307 = scmp.lt.s32.totalorder %s15, 3
        %s308 = scalar_select %p307, %s15, 3
        %s309 = smul.addr %s308, 4
        %s310 = smul.addr %s309, 8
        %s311 = scalar_lea.vmem %s1, %s310
        // Predicated region
        $region29: #{covariance_metric_forward.2} parent=23 // pred_check
          %p312 = pneg %p59
        $region30: #{covariance_metric_forward.2} parent=23 // pred_check_branch
          %314 = sbr.rel (%p312) target = $region32
        $region31: #{covariance_metric_forward.2} parent=23 // pred_region
          _
        $region32: #{covariance_metric_forward.2} parent=23 // pred_fallthru
          _
      $region24: #{covariance_metric_forward.2} parent=5 // pred_fallthru
        _
      %p315 = scmp.le.s32.totalorder 2, %s10
      // Predicated region
      $region33: #{covariance_metric_forward.2} parent=5 // pred_check
        %p316 = pneg %p315
      $region34: #{covariance_metric_forward.2} parent=5 // pred_check_branch
        %318 = sbr.rel (%p316) target = $region36
      $region35: #{covariance_metric_forward.2} parent=5 // pred_region
        %s319 = ssub.s32 %s10, 2
        // Predicated region
        $region37: #{covariance_metric_forward.2} parent=35 // pred_check
          %p320 = pneg %p65
        $region38: #{covariance_metric_forward.2} parent=35 // pred_check_branch
          %322 = sbr.rel (%p320) target = $region40
        $region39: #{covariance_metric_forward.2} parent=35 // pred_region
          %p323 = scmp.lt.s32.totalorder %s16, 3
          %s324 = scalar_select %p323, %s16, 3
          %s325 = smul.addr %s324, 4
          %s326 = smul.addr %s325, 8
          %s327 = scalar_lea.vmem %s1, %s326
        $region40: #{covariance_metric_forward.2} parent=35 // pred_fallthru
          _
      $region36: #{covariance_metric_forward.2} parent=5 // pred_fallthru
        _
    $region6: #{covariance_metric_forward.2} parent=1 // loop_footer
      %s14 = sadd.s32 1, %s10
    $region7: #{covariance_metric_forward.2} parent=1 // loop_footer_branch
      %9 = sbr.rel target = $region3
    $region8: #{covariance_metric_forward.2} parent=1 // loop_exit
      _
    %328 = vsyncpa [#allocation3], 1
    %s329 = scalar_lea.sflag [#allocation3], 1
    %330 = vsyncpa %s329, 1

// kernel: covariance_metric_forward.3
$region0: #{covariance_metric_forward.3}
  #allocation0 [shape = 'u32[]', space=smem, size = 0x4, offset = 0x4, fixed_abs, tag = 'smem constant byte address 0x4 - core index']
  #allocation1 [shape = 'u32[144,128]{1,0:T(1,128)}', space=vmem, size = 0x12000, scoped, tag = 'internal scratch']
  #allocation2 [shape = 'f32[1,1]{1,0:T(1,128)S(1)}', space=vmem, size = 0x200, scoped, tag = 'scoped memory for covariance_metric_forward.3']
  %s0 = inlined_call_operand.vmem [shape: f32[8,16,32], index: 0, kind: input, shape index: {}]
  %s1 = inlined_call_operand.vmem [shape: f32[4,32,32], index: 1, kind: input, shape index: {}]
  %s2 = inlined_call_operand.vmem [shape: f32[1,16], index: 2, kind: input, shape index: {}]
  %s3 = inlined_call_operand.<no memory space> [shape: f32[1,1], index: 3, kind: input, shape index: {}]
  %s4 = inlined_call_operand.vmem [shape: f32[8,1,4], index: 4, kind: output, shape index: {}]
  %s5 = sld [smem:[#allocation0]]
  $region49: #{covariance_metric_forward.3} parent=0
    _
  %s7 = ssub.s32 1, %s5
  %s8 = scalar_select 0, %s7, %s5
  %v9 = vstv %s3
  %10 = vst [vmem:[#allocation2] sm:$0x1] %v9
  loop: start=0, step=1, limit=10
  $region2: #{covariance_metric_forward.3} parent=0 // loop_pre_header
    _
  $region3: #{covariance_metric_forward.3} parent=0 // loop_header
    %s12 = sphi 0, %s16
    %p13 = scmp.ge.s32.totalorder %s12, 10
    %s22 = sphi 0, %s24
    %s25 = sphi 0, %s22
    %s26 = sphi 0, %s25
    %s42 = sphi 0, %s26
    %s46 = sphi 0, %s46
    %s48 = sphi 0, %s46
    %s49 = sphi 0, %s48
    %s63 = sphi 0, %s49
    %s67 = sphi 0, %s67
    %s69 = sphi 0, %s67
    %s70 = sphi 0, %s69
    %s84 = sphi 0, %s70
    %s88 = sphi 0, %s88
    %s90 = sphi 0, %s88
    %s91 = sphi 0, %s90
    %s105 = sphi 0, %s91
    %s111 = sphi 0, %s113
    %s114 = sphi 0, %s111
    %s115 = sphi 0, %s114
    %s131 = sphi 0, %s115
  $region4: #{covariance_metric_forward.3} parent=0 // loop_header_branch
    %15 = sbr.rel (%p13) target = $region8
  $region5: #{covariance_metric_forward.3} parent=0 // loop_body
    %s17 = ssub.s32 %s12, 1
    %s18 = ssub.s32 %s12, 2
    %s19 = sadd.s32 %s12, 1
    %s20 = ssub.s32 %s12, %s19
    %p21 = scmp.eq.s32.totalorder %s20, 0
    %s23 = sadd.s32 %s22, 1
    %s24 = scalar_select %p21, %s22, %s23
    %p27 = pneg %p21
    %p28 = scmp.eq.s32.totalorder %s12, 7
    %p29 = por %p27, %p28
    %p30 = scmp.ne.s32.totalorder %s22, %s25
    %p31 = scmp.eq.s32.totalorder %s12, 0
    %p32 = por %p30, %p31
    %p33 = scmp.ne.s32.totalorder %s22, %s25
    %p34 = scmp.eq.s32.totalorder %s17, 7
    %p35 = por %p33, %p34
    %p36 = scmp.ne.s32.totalorder %s25, %s26
    %p37 = scmp.eq.s32.totalorder %s17, 0
    %p38 = por %p36, %p37
    %p39 = scmp.ne.s32.totalorder %s25, %s26
    %p40 = scmp.eq.s32.totalorder %s18, 7
    %p41 = por %p39, %p40
    %p43 = scmp.ne.s32.totalorder %s26, %s42
    %p44 = scmp.eq.s32.totalorder %s18, 0
    %p45 = por %p43, %p44
    %s47 = sadd.s32 %s46, 1
    %p50 = scmp.eq.s32.totalorder %s12, 7
    %p51 = scmp.ne.s32.totalorder %s46, %s48
    %p52 = scmp.eq.s32.totalorder %s12, 0
    %p53 = por %p51, %p52
    %p54 = scmp.ne.s32.totalorder %s46, %s48
    %p55 = scmp.eq.s32.totalorder %s17, 7
    %p56 = por %p54, %p55
    %p57 = scmp.ne.s32.totalorder %s48, %s49
    %p58 = scmp.eq.s32.totalorder %s17, 0
    %p59 = por %p57, %p58
    %p60 = scmp.ne.s32.totalorder %s48, %s49
    %p61 = scmp.eq.s32.totalorder %s18, 7
    %p62 = por %p60, %p61
    %p64 = scmp.ne.s32.totalorder %s49, %s63
    %p65 = scmp.eq.s32.totalorder %s18, 0
    %p66 = por %p64, %p65
    %s68 = sadd.s32 %s67, 1
    %p71 = scmp.eq.s32.totalorder %s12, 7
    %p72 = scmp.ne.s32.totalorder %s67, %s69
    %p73 = scmp.eq.s32.totalorder %s12, 0
    %p74 = por %p72, %p73
    %p75 = scmp.ne.s32.totalorder %s67, %s69
    %p76 = scmp.eq.s32.totalorder %s17, 7
    %p77 = por %p75, %p76
    %p78 = scmp.ne.s32.totalorder %s69, %s70
    %p79 = scmp.eq.s32.totalorder %s17, 0
    %p80 = por %p78, %p79
    %p81 = scmp.ne.s32.totalorder %s69, %s70
    %p82 = scmp.eq.s32.totalorder %s18, 7
    %p83 = por %p81, %p82
    %p85 = scmp.ne.s32.totalorder %s70, %s84
    %p86 = scmp.eq.s32.totalorder %s18, 0
    %p87 = por %p85, %p86
    %s89 = sadd.s32 %s88, 1
    %p92 = scmp.eq.s32.totalorder %s12, 7
    %p93 = scmp.ne.s32.totalorder %s88, %s90
    %p94 = scmp.eq.s32.totalorder %s12, 0
    %p95 = por %p93, %p94
    %p96 = scmp.ne.s32.totalorder %s88, %s90
    %p97 = scmp.eq.s32.totalorder %s17, 7
    %p98 = por %p96, %p97
    %p99 = scmp.ne.s32.totalorder %s90, %s91
    %p100 = scmp.eq.s32.totalorder %s17, 0
    %p101 = por %p99, %p100
    %p102 = scmp.ne.s32.totalorder %s90, %s91
    %p103 = scmp.eq.s32.totalorder %s18, 7
    %p104 = por %p102, %p103
    %p106 = scmp.ne.s32.totalorder %s91, %s105
    %p107 = scmp.eq.s32.totalorder %s18, 0
    %p108 = por %p106, %p107
    %s109 = ssub.s32 %s12, %s19
    %p110 = scmp.eq.s32.totalorder %s109, 0
    %s112 = sadd.s32 %s111, 1
    %s113 = scalar_select %p110, %s111, %s112
    %p116 = pneg %p110
    %p117 = scmp.eq.s32.totalorder %s12, 7
    %p118 = por %p116, %p117
    %p119 = scmp.ne.s32.totalorder %s111, %s114
    %p120 = scmp.eq.s32.totalorder %s12, 0
    %p121 = por %p119, %p120
    %p122 = scmp.ne.s32.totalorder %s111, %s114
    %p123 = scmp.eq.s32.totalorder %s17, 7
    %p124 = por %p122, %p123
    %p125 = scmp.ne.s32.totalorder %s114, %s115
    %p126 = scmp.eq.s32.totalorder %s17, 0
    %p127 = por %p125, %p126
    %p128 = scmp.ne.s32.totalorder %s114, %s115
    %p129 = scmp.eq.s32.totalorder %s18, 7
    %p130 = por %p128, %p129
    %p132 = scmp.ne.s32.totalorder %s115, %s131
    %p133 = scmp.eq.s32.totalorder %s18, 0
    %p134 = por %p132, %p133
    %p135 = scmp.le.s32.totalorder 1, %s12
    %p136 = scmp.lt.s32.totalorder %s12, 9
    %p137 = pnand %p135, %p136
    %p138 = pneg %p137
    // Predicated region
    $region9: #{covariance_metric_forward.3} parent=5 // pred_check
      _
    $region10: #{covariance_metric_forward.3} parent=5 // pred_check_branch
      %140 = sbr.rel (%p137) target = $region12
    $region11: #{covariance_metric_forward.3} parent=5 // pred_region
      %s141 = ssub.s32 %s12, 1
      // Predicated region
      $region13: #{covariance_metric_forward.3} parent=11 // pred_check
        %p142 = pneg %p59
      $region14: #{covariance_metric_forward.3} parent=11 // pred_check_branch
        %144 = sbr.rel (%p142) target = $region16
      $region15: #{covariance_metric_forward.3} parent=11 // pred_region
        _
      $region16: #{covariance_metric_forward.3} parent=11 // pred_fallthru
        _
      // Predicated region
      $region17: #{covariance_metric_forward.3} parent=11 // pred_check
        %p145 = pneg %p80
      $region18: #{covariance_metric_forward.3} parent=11 // pred_check_branch
        %147 = sbr.rel (%p145) target = $region20
      $region19: #{covariance_metric_forward.3} parent=11 // pred_region
        _
      $region20: #{covariance_metric_forward.3} parent=11 // pred_fallthru
        _
      // Predicated region
      $region21: #{covariance_metric_forward.3} parent=11 // pred_check
        %p148 = pneg %p101
      $region22: #{covariance_metric_forward.3} parent=11 // pred_check_branch
        %150 = sbr.rel (%p148) target = $region24
      $region23: #{covariance_metric_forward.3} parent=11 // pred_region
        _
      $region24: #{covariance_metric_forward.3} parent=11 // pred_fallthru
        _
    $region12: #{covariance_metric_forward.3} parent=5 // pred_fallthru
      _
    %p151 = scmp.lt.s32.totalorder %s12, 8
    // Predicated region
    $region25: #{covariance_metric_forward.3} parent=5 // pred_check
      %p152 = pneg %p151
    $region26: #{covariance_metric_forward.3} parent=5 // pred_check_branch
      %154 = sbr.rel (%p152) target = $region28
    $region27: #{covariance_metric_forward.3} parent=5 // pred_region
      // Predicated region
      $region29: #{covariance_metric_forward.3} parent=27 // pred_check
        %p155 = pneg %p32
      $region30: #{covariance_metric_forward.3} parent=27 // pred_check_branch
        %157 = sbr.rel (%p155) target = $region32
      $region31: #{covariance_metric_forward.3} parent=27 // pred_region
        %p158 = scmp.lt.s32.totalorder %s12, 7
        %s159 = scalar_select %p158, %s12, 7
        %s160 = smul.addr %s159, 2
        %s161 = smul.addr %s160, 8
        %s162 = scalar_lea.vmem %s0, %s161
      $region32: #{covariance_metric_forward.3} parent=27 // pred_fallthru
        _
    $region28: #{covariance_metric_forward.3} parent=5 // pred_fallthru
      _
    %p163 = scmp.le.s32.totalorder 1, %s12
    %p164 = scmp.lt.s32.totalorder %s12, 9
    %p165 = pnand %p163, %p164
    %p166 = pneg %p165
    // Predicated region
    $region33: #{covariance_metric_forward.3} parent=5 // pred_check
      _
    $region34: #{covariance_metric_forward.3} parent=5 // pred_check_branch
      %168 = sbr.rel (%p165) target = $region36
    $region35: #{covariance_metric_forward.3} parent=5 // pred_region
      %s169 = ssub.s32 %s12, 1
      %p170 = scmp.lt.s32.totalorder %s17, 7
      %s171 = scalar_select %p170, %s17, 7
      %s172 = smul.addr %s171, 2
      %s173 = smul.addr %s172, 8
      %s174 = scalar_lea.vmem %s0, %s173
      %p175 = pneg %p38
      %p176 = pneg %p35
      %p177 = pneg %p59
      %p178 = pneg %p56
      %p179 = pneg %p80
      %p180 = pneg %p77
      %p181 = pneg %p101
      %p182 = pneg %p98
      %p183 = pneg %p127
      %p184 = pneg %p124
      %p185 = scmp.lt.s32.totalorder %s17, 7
      %s186 = scalar_select %p185, %s17, 7
      %s187 = scalar_lea.vmem %s4, %s186
      %p188 = scmp.lt.s32.totalorder %s17, 7
      %s189 = scalar_select %p188, %s17, 7
      %s190 = smul.addr %s189, 2
      %s191 = smul.addr %s190, 8
      %s192 = scalar_lea.vmem %s0, %s191
      %p193 = scmp.lt.s32.totalorder %s17, 7
      %s194 = scalar_select %p193, %s17, 7
      %s195 = scalar_lea.vmem %s4, %s194
      %v196 = vld [vmem:[%s192] sm:$0xff]
      %v197 = vld [vmem:[%s192 + $0x8] sm:$0xff]
      %vm198 = vcmask 261120
      %v199 = vsel %vm198, %v196, 0.0
      %v200 = vsel %vm198, %v197, 0.0
      %v201 = vadd.f32 %v199, %v200
      %v202 = vrot.slane %v201, 4
      %v203 = vadd.f32 %v201, %v202
      %v204 = vrot.slane %v203, 2
      %v205 = vadd.f32 %v203, %v204
      %v206 = vrot.slane %v205, 1
      %v207 = vadd.f32 %v205, %v206
      %v208 = vrcp.pop 16.0
      %v209 = vmul.f32 %v207, %v208
      %v210 = vsub.f32 %v196, %v209
      %v211 = vsub.f32 %v197, %v209
      %v212 = vld [vmem:[%s1] sm:$0xff]
      %v213 = vld [vmem:[%s1 + $0x8] sm:$0xff]
      %v214 = vld [vmem:[%s1 + $0x10] sm:$0xff]
      %v215 = vld [vmem:[%s1 + $0x18] sm:$0xff]
      %v217 = vsel %vm198, %v210, 0
      %v220 = vsel %vm198, %v211, 0
      %222 = vmatprep.subr.mxu0 0.0
      %223 = vmatpush1.msra.mxu0 %v212
      %224 = vmatprep.subr.mxu0 0.0
      %225 = vmatpush1.msra.mxu0 %v213
      %226 = vmatprep.subr.mxu0 0.0
      %227 = vmatpush1.msra.mxu0 %v214
      %228 = vmatprep.subr.mxu0 0.0
      %229 = vmatpush1.msra.mxu0 %v215
      %230 = vmatprep.subr.mxu0 0.0
      %231 = vmatpush1.msra.mxu0 0.0
      %232 = vmatprep.subr.mxu0 0.0
      %233 = vmatpush1.msra.mxu0 0.0
      %234 = vmatprep.subr.mxu0 0.0
      %235 = vmatpush1.msra.mxu0 0.0
      %236 = vmatprep.subr.mxu0 0.0
      %237 = vmatpush1.msra.mxu0 0.0
      %238 = vmatprep.subr.mxu0 0.0
      %239 = vmatpush1.msra.mxu0 0.0
      %240 = vmatprep.subr.mxu0 0.0
      %241 = vmatpush1.msra.mxu0 0.0
      %242 = vmatprep.subr.mxu0 0.0
      %243 = vmatpush1.msra.mxu0 0.0
      %244 = vmatprep.subr.mxu0 0.0
      %245 = vmatpush1.msra.mxu0 0.0
      %246 = vmatprep.subr.mxu0 0.0
      %247 = vmatpush1.msra.mxu0 0.0
      %248 = vmatprep.subr.mxu0 0.0
      %249 = vmatpush1.msra.mxu0 0.0
      %250 = vmatprep.subr.mxu0 0.0
      %251 = vmatpush1.msra.mxu0 0.0
      %252 = vmatprep.subr.mxu0 0.0
      %253 = vmatpush1.msra.mxu0 0.0
      %254 = vmatprep.subr.mxu0 0.0
      %255 = vmatpush1.msra.mxu0 0.0
      %256 = vmatprep.subr.mxu0 0.0
      %257 = vmatpush1.msra.mxu0 0.0
      %258 = vmatprep.subr.mxu0 0.0
      %259 = vmatpush1.msra.mxu0 0.0
      %260 = vmatprep.subr.mxu0 0.0
      %261 = vmatpush1.msra.mxu0 0.0
      %262 = vmatprep.subr.mxu0 0.0
      %263 = vmatpush1.msra.mxu0 0.0
      %264 = vmatprep.subr.mxu0 0.0
      %265 = vmatpush1.msra.mxu0 0.0
      %266 = vmatprep.subr.mxu0 0.0
      %267 = vmatpush1.msra.mxu0 0.0
      %268 = vmatprep.subr.mxu0 0.0
      %269 = vmatpush1.msra.mxu0 0.0
      %270 = vmatprep.subr.mxu0 0.0
      %271 = vmatpush1.msra.mxu0 0.0
      %272 = vmatprep.subr.mxu0 0.0
      %273 = vmatpush1.msra.mxu0 0.0
      %274 = vmatprep.subr.mxu0 0.0
      %275 = vmatpush1.msra.mxu0 0.0
      %276 = vmatprep.subr.mxu0 0.0
      %277 = vmatpush1.msra.mxu0 0.0
      %278 = vmatprep.subr.mxu0 0.0
      %279 = vmatpush1.msra.mxu0 0.0
      %280 = vmatprep.subr.mxu0 0.0
      %281 = vmatpush1.msra.mxu0 0.0
      %282 = vmatprep.subr.mxu0 0.0
      %283 = vmatpush1.msra.mxu0 0.0
      %284 = vmatprep.subr.mxu0 0.0
      %285 = vmatpush1.msra.mxu0 0.0
      %286 = vmatprep.mubr.f32.mxu0 0.0
      %287 = vmatmul.mubr.f32.gmra.mrb[0].mxu0 %v217
      %v288 = vpop.f32.mrb[0].mxu0
      %v289 = vadd.f32 0.0, %v288
      %v290 = vpop.f32.mrb[0].mxu0
      %291 = vmatprep.mubr.f32.mxu0 0.0
      %292 = vmatmul.mubr.f32.gmra.mrb[0].mxu0 %v220
      %v293 = vpop.f32.mrb[0].mxu0
      %v294 = vadd.f32 0.0, %v293
      %v295 = vpop.f32.mrb[0].mxu0
      %296 = vdwg.mxu0
      %v297 = vmul.f32 %v289, %v210
      %v298 = vmul.f32 %v294, %v211
      %v299 = vsel %vm198, %v297, 0.0
      %300 = vadd.xlane.f32.xlu0 %v299
      %v301 = vpop.xlane.xlu0 %300
      %v302 = vsel %vm198, %v298, 0.0
      %303 = vadd.xlane.f32.xlu0 %v302
      %v304 = vpop.xlane.xlu0 %303
      %s305 = scalar_lea.vmem %s1, 32
      %v306 = vld [vmem:[%s305] sm:$0xff]
      %v307 = vld [vmem:[%s305 + $0x8] sm:$0xff]
      %v308 = vld [vmem:[%s305 + $0x10] sm:$0xff]
      %v309 = vld [vmem:[%s305 + $0x18] sm:$0xff]
      %310 = vmatprep.subr.mxu0 0.0
      %311 = vmatpush1.msra.mxu0 %v306
      %312 = vmatprep.subr.mxu0 0.0
      %313 = vmatpush1.msra.mxu0 %v307
      %314 = vmatprep.subr.mxu0 0.0
      %315 = vmatpush1.msra.mxu0 %v308
      %316 = vmatprep.subr.mxu0 0.0
      %317 = vmatpush1.msra.mxu0 %v309
      %318 = vmatprep.subr.mxu0 0.0
      %319 = vmatpush1.msra.mxu0 0.0
      %320 = vmatprep.subr.mxu0 0.0
      %321 = vmatpush1.msra.mxu0 0.0
      %322 = vmatprep.subr.mxu0 0.0
      %323 = vmatpush1.msra.mxu0 0.0
      %324 = vmatprep.subr.mxu0 0.0
      %325 = vmatpush1.msra.mxu0 0.0
      %326 = vmatprep.subr.mxu0 0.0
      %327 = vmatpush1.msra.mxu0 0.0
      %328 = vmatprep.subr.mxu0 0.0
      %329 = vmatpush1.msra.mxu0 0.0
      %330 = vmatprep.subr.mxu0 0.0
      %331 = vmatpush1.msra.mxu0 0.0
      %332 = vmatprep.subr.mxu0 0.0
      %333 = vmatpush1.msra.mxu0 0.0
      %334 = vmatprep.subr.mxu0 0.0
      %335 = vmatpush1.msra.mxu0 0.0
      %336 = vmatprep.subr.mxu0 0.0
      %337 = vmatpush1.msra.mxu0 0.0
      %338 = vmatprep.subr.mxu0 0.0
      %339 = vmatpush1.msra.mxu0 0.0
      %340 = vmatprep.subr.mxu0 0.0
      %341 = vmatpush1.msra.mxu0 0.0
      %342 = vmatprep.subr.mxu0 0.0
      %343 = vmatpush1.msra.mxu0 0.0
      %344 = vmatprep.subr.mxu0 0.0
      %345 = vmatpush1.msra.mxu0 0.0
      %346 = vmatprep.subr.mxu0 0.0
      %347 = vmatpush1.msra.mxu0 0.0
      %348 = vmatprep.subr.mxu0 0.0
      %349 = vmatpush1.msra.mxu0 0.0
      %350 = vmatprep.subr.mxu0 0.0
      %351 = vmatpush1.msra.mxu0 0.0
      %352 = vmatprep.subr.mxu0 0.0
      %353 = vmatpush1.msra.mxu0 0.0
      %354 = vmatprep.subr.mxu0 0.0
      %355 = vmatpush1.msra.mxu0 0.0
      %356 = vmatprep.subr.mxu0 0.0
      %357 = vmatpush1.msra.mxu0 0.0
      %358 = vmatprep.subr.mxu0 0.0
      %359 = vmatpush1.msra.mxu0 0.0
      %360 = vmatprep.subr.mxu0 0.0
      %361 = vmatpush1.msra.mxu0 0.0
      %362 = vmatprep.subr.mxu0 0.0
      %363 = vmatpush1.msra.mxu0 0.0
      %364 = vmatprep.subr.mxu0 0.0
      %365 = vmatpush1.msra.mxu0 0.0
      %366 = vmatprep.subr.mxu0 0.0
      %367 = vmatpush1.msra.mxu0 0.0
      %368 = vmatprep.subr.mxu0 0.0
      %369 = vmatpush1.msra.mxu0 0.0
      %370 = vmatprep.subr.mxu0 0.0
      %371 = vmatpush1.msra.mxu0 0.0
      %372 = vmatprep.subr.mxu0 0.0
      %373 = vmatpush1.msra.mxu0 0.0
      %374 = vmatprep.mubr.f32.mxu0 0.0
      %375 = vmatmul.mubr.f32.gmra.mrb[0].mxu0 %v217
      %v376 = vpop.f32.mrb[0].mxu0
      %v377 = vadd.f32 0.0, %v376
      %v378 = vpop.f32.mrb[0].mxu0
      %379 = vmatprep.mubr.f32.mxu0 0.0
      %380 = vmatmul.mubr.f32.gmra.mrb[0].mxu0 %v220
      %v381 = vpop.f32.mrb[0].mxu0
      %v382 = vadd.f32 0.0, %v381
      %v383 = vpop.f32.mrb[0].mxu0
      %384 = vdwg.mxu0
      %v385 = vmul.f32 %v377, %v210
      %v386 = vmul.f32 %v382, %v211
      %v387 = vsel %vm198, %v385, 0.0
      %388 = vadd.xlane.f32.xlu0 %v387
      %v389 = vpop.xlane.xlu0 %388
      %v390 = vsel %vm198, %v386, 0.0
      %391 = vadd.xlane.f32.xlu0 %v390
      %v392 = vpop.xlane.xlu0 %391
      %s393 = scalar_lea.vmem %s1, 64
      %v394 = vld [vmem:[%s393] sm:$0xff]
      %v395 = vld [vmem:[%s393 + $0x8] sm:$0xff]
      %v396 = vld [vmem:[%s393 + $0x10] sm:$0xff]
      %v397 = vld [vmem:[%s393 + $0x18] sm:$0xff]
      %398 = vmatprep.subr.mxu0 0.0
      %399 = vmatpush1.msra.mxu0 %v394
      %400 = vmatprep.subr.mxu0 0.0
      %401 = vmatpush1.msra.mxu0 %v395
      %402 = vmatprep.subr.mxu0 0.0
      %403 = vmatpush1.msra.mxu0 %v396
      %404 = vmatprep.subr.mxu0 0.0
      %405 = vmatpush1.msra.mxu0 %v397
      %406 = vmatprep.subr.mxu0 0.0
      %407 = vmatpush1.msra.mxu0 0.0
      %408 = vmatprep.subr.mxu0 0.0
      %409 = vmatpush1.msra.mxu0 0.0
      %410 = vmatprep.subr.mxu0 0.0
      %411 = vmatpush1.msra.mxu0 0.0
      %412 = vmatprep.subr.mxu0 0.0
      %413 = vmatpush1.msra.mxu0 0.0
      %414 = vmatprep.subr.mxu0 0.0
      %415 = vmatpush1.msra.mxu0 0.0
      %416 = vmatprep.subr.mxu0 0.0
      %417 = vmatpush1.msra.mxu0 0.0
      %418 = vmatprep.subr.mxu0 0.0
      %419 = vmatpush1.msra.mxu0 0.0
      %420 = vmatprep.subr.mxu0 0.0
      %421 = vmatpush1.msra.mxu0 0.0
      %422 = vmatprep.subr.mxu0 0.0
      %423 = vmatpush1.msra.mxu0 0.0
      %424 = vmatprep.subr.mxu0 0.0
      %425 = vmatpush1.msra.mxu0 0.0
      %426 = vmatprep.subr.mxu0 0.0
      %427 = vmatpush1.msra.mxu0 0.0
      %428 = vmatprep.subr.mxu0 0.0
      %429 = vmatpush1.msra.mxu0 0.0
      %430 = vmatprep.subr.mxu0 0.0
      %431 = vmatpush1.msra.mxu0 0.0
      %432 = vmatprep.subr.mxu0 0.0
      %433 = vmatpush1.msra.mxu0 0.0
      %434 = vmatprep.subr.mxu0 0.0
      %435 = vmatpush1.msra.mxu0 0.0
      %436 = vmatprep.subr.mxu0 0.0
      %437 = vmatpush1.msra.mxu0 0.0
      %438 = vmatprep.subr.mxu0 0.0
      %439 = vmatpush1.msra.mxu0 0.0
      %440 = vmatprep.subr.mxu0 0.0
      %441 = vmatpush1.msra.mxu0 0.0
      %442 = vmatprep.subr.mxu0 0.0
      %443 = vmatpush1.msra.mxu0 0.0
      %444 = vmatprep.subr.mxu0 0.0
      %445 = vmatpush1.msra.mxu0 0.0
      %446 = vmatprep.subr.mxu0 0.0
      %447 = vmatpush1.msra.mxu0 0.0
      %448 = vmatprep.subr.mxu0 0.0
      %449 = vmatpush1.msra.mxu0 0.0
      %450 = vmatprep.subr.mxu0 0.0
      %451 = vmatpush1.msra.mxu0 0.0
      %452 = vmatprep.subr.mxu0 0.0
      %453 = vmatpush1.msra.mxu0 0.0
      %454 = vmatprep.subr.mxu0 0.0
      %455 = vmatpush1.msra.mxu0 0.0
      %456 = vmatprep.subr.mxu0 0.0
      %457 = vmatpush1.msra.mxu0 0.0
      %458 = vmatprep.subr.mxu0 0.0
      %459 = vmatpush1.msra.mxu0 0.0
      %460 = vmatprep.subr.mxu0 0.0
      %461 = vmatpush1.msra.mxu0 0.0
      %462 = vmatprep.mubr.f32.mxu0 0.0
      %463 = vmatmul.mubr.f32.gmra.mrb[0].mxu0 %v217
      %v464 = vpop.f32.mrb[0].mxu0
      %v465 = vadd.f32 0.0, %v464
      %v466 = vpop.f32.mrb[0].mxu0
      %467 = vmatprep.mubr.f32.mxu0 0.0
      %468 = vmatmul.mubr.f32.gmra.mrb[0].mxu0 %v220
      %v469 = vpop.f32.mrb[0].mxu0
      %v470 = vadd.f32 0.0, %v469
      %v471 = vpop.f32.mrb[0].mxu0
      %472 = vdwg.mxu0
      %v473 = vmul.f32 %v465, %v210
      %v474 = vmul.f32 %v470, %v211
      %v475 = vsel %vm198, %v473, 0.0
      %476 = vadd.xlane.f32.xlu0 %v475
      %v477 = vpop.xlane.xlu0 %476
      %v478 = vsel %vm198, %v474, 0.0
      %479 = vadd.xlane.f32.xlu0 %v478
      %v480 = vpop.xlane.xlu0 %479
      %s481 = scalar_lea.vmem %s1, 96
      %v482 = vld [vmem:[%s481] sm:$0xff]
      %v483 = vld [vmem:[%s481 + $0x8] sm:$0xff]
      %v484 = vld [vmem:[%s481 + $0x10] sm:$0xff]
      %v485 = vld [vmem:[%s481 + $0x18] sm:$0xff]
      %486 = vmatprep.subr.mxu0 0.0
      %487 = vmatpush1.msra.mxu0 %v482
      %488 = vmatprep.subr.mxu0 0.0
      %489 = vmatpush1.msra.mxu0 %v483
      %490 = vmatprep.subr.mxu0 0.0
      %491 = vmatpush1.msra.mxu0 %v484
      %492 = vmatprep.subr.mxu0 0.0
      %493 = vmatpush1.msra.mxu0 %v485
      %494 = vmatprep.subr.mxu0 0.0
      %495 = vmatpush1.msra.mxu0 0.0
      %496 = vmatprep.subr.mxu0 0.0
      %497 = vmatpush1.msra.mxu0 0.0
      %498 = vmatprep.subr.mxu0 0.0
      %499 = vmatpush1.msra.mxu0 0.0
      %500 = vmatprep.subr.mxu0 0.0
      %501 = vmatpush1.msra.mxu0 0.0
      %502 = vmatprep.subr.mxu0 0.0
      %503 = vmatpush1.msra.mxu0 0.0
      %504 = vmatprep.subr.mxu0 0.0
      %505 = vmatpush1.msra.mxu0 0.0
      %506 = vmatprep.subr.mxu0 0.0
      %507 = vmatpush1.msra.mxu0 0.0
      %508 = vmatprep.subr.mxu0 0.0
      %509 = vmatpush1.msra.mxu0 0.0
      %510 = vmatprep.subr.mxu0 0.0
      %511 = vmatpush1.msra.mxu0 0.0
      %512 = vmatprep.subr.mxu0 0.0
      %513 = vmatpush1.msra.mxu0 0.0
      %514 = vmatprep.subr.mxu0 0.0
      %515 = vmatpush1.msra.mxu0 0.0
      %516 = vmatprep.subr.mxu0 0.0
      %517 = vmatpush1.msra.mxu0 0.0
      %518 = vmatprep.subr.mxu0 0.0
      %519 = vmatpush1.msra.mxu0 0.0
      %520 = vmatprep.subr.mxu0 0.0
      %521 = vmatpush1.msra.mxu0 0.0
      %522 = vmatprep.subr.mxu0 0.0
      %523 = vmatpush1.msra.mxu0 0.0
      %524 = vmatprep.subr.mxu0 0.0
      %525 = vmatpush1.msra.mxu0 0.0
      %526 = vmatprep.subr.mxu0 0.0
      %527 = vmatpush1.msra.mxu0 0.0
      %528 = vmatprep.subr.mxu0 0.0
      %529 = vmatpush1.msra.mxu0 0.0
      %530 = vmatprep.subr.mxu0 0.0
      %531 = vmatpush1.msra.mxu0 0.0
      %532 = vmatprep.subr.mxu0 0.0
      %533 = vmatpush1.msra.mxu0 0.0
      %534 = vmatprep.subr.mxu0 0.0
      %535 = vmatpush1.msra.mxu0 0.0
      %536 = vmatprep.subr.mxu0 0.0
      %537 = vmatpush1.msra.mxu0 0.0
      %538 = vmatprep.subr.mxu0 0.0
      %539 = vmatpush1.msra.mxu0 0.0
      %540 = vmatprep.subr.mxu0 0.0
      %541 = vmatpush1.msra.mxu0 0.0
      %542 = vmatprep.subr.mxu0 0.0
      %543 = vmatpush1.msra.mxu0 0.0
      %544 = vmatprep.subr.mxu0 0.0
      %545 = vmatpush1.msra.mxu0 0.0
      %546 = vmatprep.subr.mxu0 0.0
      %547 = vmatpush1.msra.mxu0 0.0
      %548 = vmatprep.subr.mxu0 0.0
      %549 = vmatpush1.msra.mxu0 0.0
      %550 = vmatprep.mubr.f32.mxu0 0.0
      %551 = vmatmul.mubr.f32.gmra.mrb[0].mxu0 %v217
      %v552 = vpop.f32.mrb[0].mxu0
      %v553 = vadd.f32 0.0, %v552
      %v554 = vpop.f32.mrb[0].mxu0
      %555 = vmatprep.mubr.f32.mxu0 0.0
      %556 = vmatmul.mubr.f32.gmra.mrb[0].mxu0 %v220
      %v557 = vpop.f32.mrb[0].mxu0
      %v558 = vadd.f32 0.0, %v557
      %v559 = vpop.f32.mrb[0].mxu0
      %560 = vdwg.mxu0
      %v561 = vmul.f32 %v553, %v210
      %v562 = vmul.f32 %v558, %v211
      %v563 = vsel %vm198, %v561, 0.0
      %564 = vadd.xlane.f32.xlu0 %v563
      %v565 = vpop.xlane.xlu0 %564
      %v566 = vsel %vm198, %v562, 0.0
      %567 = vadd.xlane.f32.xlu0 %v566
      %v568 = vpop.xlane.xlu0 %567
      %vm569 = vcmask 7168
      %v570 = vsel %vm569, %v301, %v389
      %v571 = vsel %vm569, %v304, %v392
      %vm572 = vcmask 15360
      %v573 = vsel %vm572, %v570, %v477
      %v574 = vsel %vm572, %v571, %v480
      %vm575 = vcmask 23552
      %v576 = vsel %vm575, %v573, %v565
      %v577 = vsel %vm575, %v574, %v568
      %vm578 = vcmp.ge.f32.partialorder %v576, 0.0
      %vm579 = vcmp.ge.f32.partialorder %v577, 0.0
      %v580 = vmul.f32 %v576, 0.2
      %v581 = vmul.f32 %v577, 0.2
      %v582 = vsel %vm578, %v576, %v580
      %v583 = vsel %vm579, %v577, %v581
      %v584 = vld [vmem:[%s2] sm:$0x1]
      %v585 = vld [vmem:[#allocation2] sm:$0x1]
      %587 = vset.pattern.permute.xlu0 0
      %588 = vperm.xlu0 %587, %v585
      %v589 = vpop.permute.xlu0 %588
      %v591 = vlaneseq
      %v592 = vshrl.u32 %v591, 7
      %v593 = vsub.s32 0, %v592
      %v594 = vrot.slane %v589, %v593
      %vm595 = vcmask 130048
      %v597 = vsel %vm595, %v584, 0
      %599 = vmatprep.subr.mxu0 0.0
      %600 = vmatpush1.msra.mxu0 %v582
      %601 = vmatprep.subr.mxu0 0.0
      %602 = vmatpush1.msra.mxu0 %v583
      %603 = vmatprep.subr.mxu0 0.0
      %604 = vmatpush1.msra.mxu0 0.0
      %605 = vmatprep.subr.mxu0 0.0
      %606 = vmatpush1.msra.mxu0 0.0
      %607 = vmatprep.subr.mxu0 0.0
      %608 = vmatpush1.msra.mxu0 0.0
      %609 = vmatprep.subr.mxu0 0.0
      %610 = vmatpush1.msra.mxu0 0.0
      %611 = vmatprep.subr.mxu0 0.0
      %612 = vmatpush1.msra.mxu0 0.0
      %613 = vmatprep.subr.mxu0 0.0
      %614 = vmatpush1.msra.mxu0 0.0
      %615 = vmatprep.subr.mxu0 0.0
      %616 = vmatpush1.msra.mxu0 0.0
      %617 = vmatprep.subr.mxu0 0.0
      %618 = vmatpush1.msra.mxu0 0.0
      %619 = vmatprep.subr.mxu0 0.0
      %620 = vmatpush1.msra.mxu0 0.0
      %621 = vmatprep.subr.mxu0 0.0
      %622 = vmatpush1.msra.mxu0 0.0
      %623 = vmatprep.subr.mxu0 0.0
      %624 = vmatpush1.msra.mxu0 0.0
      %625 = vmatprep.subr.mxu0 0.0
      %626 = vmatpush1.msra.mxu0 0.0
      %627 = vmatprep.subr.mxu0 0.0
      %628 = vmatpush1.msra.mxu0 0.0
      %629 = vmatprep.subr.mxu0 0.0
      %630 = vmatpush1.msra.mxu0 0.0
      %631 = vmatprep.subr.mxu0 0.0
      %632 = vmatpush1.msra.mxu0 0.0
      %633 = vmatprep.subr.mxu0 0.0
      %634 = vmatpush1.msra.mxu0 0.0
      %635 = vmatprep.subr.mxu0 0.0
      %636 = vmatpush1.msra.mxu0 0.0
      %637 = vmatprep.subr.mxu0 0.0
      %638 = vmatpush1.msra.mxu0 0.0
      %639 = vmatprep.subr.mxu0 0.0
      %640 = vmatpush1.msra.mxu0 0.0
      %641 = vmatprep.subr.mxu0 0.0
      %642 = vmatpush1.msra.mxu0 0.0
      %643 = vmatprep.subr.mxu0 0.0
      %644 = vmatpush1.msra.mxu0 0.0
      %645 = vmatprep.subr.mxu0 0.0
      %646 = vmatpush1.msra.mxu0 0.0
      %647 = vmatprep.subr.mxu0 0.0
      %648 = vmatpush1.msra.mxu0 0.0
      %649 = vmatprep.subr.mxu0 0.0
      %650 = vmatpush1.msra.mxu0 0.0
      %651 = vmatprep.subr.mxu0 0.0
      %652 = vmatpush1.msra.mxu0 0.0
      %653 = vmatprep.subr.mxu0 0.0
      %654 = vmatpush1.msra.mxu0 0.0
      %655 = vmatprep.subr.mxu0 0.0
      %656 = vmatpush1.msra.mxu0 0.0
      %657 = vmatprep.subr.mxu0 0.0
      %658 = vmatpush1.msra.mxu0 0.0
      %659 = vmatprep.subr.mxu0 0.0
      %660 = vmatpush1.msra.mxu0 0.0
      %661 = vmatprep.subr.mxu0 0.0
      %662 = vmatpush1.msra.mxu0 0.0
      %663 = vmatprep.mubr.f32.mxu0 0.0
      %664 = vmatmul.mubr.f32.gmra.mrb[0].mxu0 %v597
      %v665 = vpop.f32.mrb[0].mxu0
      %v666 = vadd.f32 %v594, %v665
      %v667 = vpop.f32.mrb[0].mxu0
      %668 = vdwg.mxu0
      %vm669 = vcmask 24576
      %670 = vst.msk [vmem:[%s195] sm:$0x1] %vm669, %v666
      %p671 = scmp.lt.s32.totalorder %s17, 7
      %s672 = scalar_select %p671, %s17, 7
      %s673 = scalar_lea.vmem %s4, %s672
      // Predicated region
      $region37: #{covariance_metric_forward.3} parent=35 // pred_check
        %p674 = pneg %p124
      $region38: #{covariance_metric_forward.3} parent=35 // pred_check_branch
        %676 = sbr.rel (%p674) target = $region40
      $region39: #{covariance_metric_forward.3} parent=35 // pred_region
        _
      $region40: #{covariance_metric_forward.3} parent=35 // pred_fallthru
        _
    $region36: #{covariance_metric_forward.3} parent=5 // pred_fallthru
      _
    %p677 = scmp.le.s32.totalorder 2, %s12
    // Predicated region
    $region41: #{covariance_metric_forward.3} parent=5 // pred_check
      %p678 = pneg %p677
    $region42: #{covariance_metric_forward.3} parent=5 // pred_check_branch
      %680 = sbr.rel (%p678) target = $region44
    $region43: #{covariance_metric_forward.3} parent=5 // pred_region
      %s681 = ssub.s32 %s12, 2
      // Predicated region
      $region45: #{covariance_metric_forward.3} parent=43 // pred_check
        %p682 = pneg %p130
      $region46: #{covariance_metric_forward.3} parent=43 // pred_check_branch
        %684 = sbr.rel (%p682) target = $region48
      $region47: #{covariance_metric_forward.3} parent=43 // pred_region
        %p685 = scmp.lt.s32.totalorder %s18, 7
        %s686 = scalar_select %p685, %s18, 7
        %s687 = scalar_lea.vmem %s4, %s686
      $region48: #{covariance_metric_forward.3} parent=43 // pred_fallthru
        _
    $region44: #{covariance_metric_forward.3} parent=5 // pred_fallthru
      _
  $region6: #{covariance_metric_forward.3} parent=0 // loop_footer
    %s16 = sadd.s32 1, %s12
  $region7: #{covariance_metric_forward.3} parent=0 // loop_footer_branch
    %11 = sbr.rel target = $region3
  $region8: #{covariance_metric_forward.3} parent=0 // loop_exit
    _

</llo_original>
